<compile_context>
chip_gen: v6e
topology: v6e:2x2x1
jax: 0.10.0
libtpu: 0.0.40
codegen_flags: <defaults>
</compile_context>

<pallas_src>
import functools

import jax
import jax.numpy as jnp
from jax.experimental import pallas as pl
from jax.experimental.pallas import tpu as pltpu


def _round_up(n, m):
    return ((n + m - 1) // m) * m


def _qnet_kernel(x_ref, w1_ref, w2_ref, o_ref):
    # hidden = relu(x_pad @ W1p)   (bias already folded into W1p via x's ones-column)
    h = jnp.dot(x_ref[...], w1_ref[...], preferred_element_type=jnp.float32)
    h = jnp.maximum(h, 0.0)
    # out = hidden @ W2p           (bias folded into W2p via hidden's ones-column)
    y = jnp.dot(h.astype(w2_ref.dtype), w2_ref[...],
                preferred_element_type=jnp.float32)
    o_ref[...] = y.astype(o_ref.dtype)


def prepare_params(w1_t, b1, w2_t, b2, dtype=jnp.bfloat16):
    """One-time prep: pad to 128-lane shapes and fold biases into the weights.

    w1_t: (in, hidden), b1: (hidden,), w2_t: (hidden, out), b2: (out,)
    Returns W1p: (in_pad, hid_pad), W2p: (hid_pad, out_pad), both `dtype`.
    Layout contract:
      * x must be padded to in_pad columns with column `in` set to 1.0 (bias feature).
      * W1p[in, hidden] = 1.0 propagates that ones-feature into hidden column `hidden`,
        which (after relu(1.0)==1.0) multiplies W2p's bias row.
    """
    in_f, hid = w1_t.shape
    hid2, out_f = w2_t.shape
    assert hid == hid2
    in_pad = _round_up(in_f + 1, 128)
    hid_pad = _round_up(hid + 1, 128)
    out_pad = _round_up(out_f, 128)

    w1p = jnp.zeros((in_pad, hid_pad), jnp.float32)
    w1p = w1p.at[:in_f, :hid].set(w1_t.astype(jnp.float32))
    w1p = w1p.at[in_f, :hid].set(jnp.reshape(b1, (hid,)).astype(jnp.float32))
    w1p = w1p.at[in_f, hid].set(1.0)  # carry the bias feature into the hidden layer

    w2p = jnp.zeros((hid_pad, out_pad), jnp.float32)
    w2p = w2p.at[:hid, :out_f].set(w2_t.astype(jnp.float32))
    w2p = w2p.at[hid, :out_f].set(jnp.reshape(b2, (out_f,)).astype(jnp.float32))

    return w1p.astype(dtype), w2p.astype(dtype)


@functools.partial(jax.jit, static_argnames=("in_features", "output_size"))
def linear_qnet_forward(x, w1p, w2p, *, in_features, output_size):
    """x: (B, in_features) f32/bf16 -> (B, output_size) f32."""
    B = x.shape[0]
    in_pad, hid_pad = w1p.shape
    out_pad = w2p.shape[1]

    # Batch tile: multiple of 8 sublanes; cap so x/out tiles stay small even when
    # double-buffered (256*128*2B per buffer -> well under every VMEM budget).
    tile_b = 256 if B >= 256 else _round_up(max(B, 8), 8)
    b_pad = _round_up(B, tile_b)
    grid = (b_pad // tile_b,)

    # Pad x to (b_pad, in_pad) bf16 and install the constant 1.0 bias column.
    xp = jnp.zeros((b_pad, in_pad), w1p.dtype)
    xp = xp.at[:B, :in_features].set(x.astype(w1p.dtype))
    xp = xp.at[:B, in_features].set(jnp.ones((B,), w1p.dtype))

    itemsize = jnp.dtype(w1p.dtype).itemsize
    cost = pl.CostEstimate(
        flops=2 * b_pad * (in_pad * hid_pad + hid_pad * out_pad),
        transcendentals=0,
        bytes_accessed=(b_pad * in_pad * itemsize          # x tiles
                        + b_pad * out_pad * 4              # f32 output
                        + in_pad * hid_pad * itemsize      # W1p (resident)
                        + hid_pad * out_pad * itemsize),   # W2p (resident)
    )

    out_padded = pl.pallas_call(
        _qnet_kernel,
        out_shape=jax.ShapeDtypeStruct((b_pad, out_pad), jnp.float32),
        grid=grid,
        in_specs=[
            pl.BlockSpec((tile_b, in_pad), lambda i: (i, 0)),     # x: tiled over batch
            pl.BlockSpec((in_pad, hid_pad), lambda i: (0, 0)),    # W1p: VMEM-resident
            pl.BlockSpec((hid_pad, out_pad), lambda i: (0, 0)),   # W2p: VMEM-resident
        ],
        out_specs=pl.BlockSpec((tile_b, out_pad), lambda i: (i, 0)),
        compiler_params=pltpu.CompilerParams(
            dimension_semantics=("parallel",),        # v7x: both TCs split the batch
            vmem_limit_bytes=32 * 1024 * 1024,        # safe on v5e/v6e/v7x; ample here
        ),
        cost_estimate=cost,
    )(xp, w1p, w2p)

    return out_padded[:B, :output_size]


def init_params(key, input_size, hidden_size, output_size, dtype=jnp.float32):
    """Deterministic init mimicking nn.Linear default (uniform +/- 1/sqrt(fan_in)).
    Weights stored pre-transposed as (in, out)."""
    k1, k2, k3, k4 = jax.random.split(key, 4)
    bound1 = 1.0 / (input_size ** 0.5)
    bound2 = 1.0 / (hidden_size ** 0.5)
    w1_t = jax.random.uniform(k1, (input_size, hidden_size), dtype,
                              minval=-bound1, maxval=bound1)
    b1 = jax.random.uniform(k2, (hidden_size,), dtype,
                            minval=-bound1, maxval=bound1)
    w2_t = jax.random.uniform(k3, (hidden_size, output_size), dtype,
                              minval=-bound2, maxval=bound2)
    b2 = jax.random.uniform(k4, (output_size,), dtype,
                            minval=-bound2, maxval=bound2)
    return w1_t, b1, w2_t, b2


if __name__ == "__main__":
    # Classic snake-agent Q-net sizes: input=11, hidden=32, output=3.
    batch, input_size, hidden_size, output_size = 2, 11, 32, 3

    key = jax.random.PRNGKey(0)
    kx, kp = jax.random.split(key)
    x = jax.random.normal(kx, (batch, input_size), jnp.float32)
    w1_t, b1, w2_t, b2 = init_params(kp, input_size, hidden_size, output_size)

    # One-time prep: padded bf16 weights with folded biases.
    w1p, w2p = prepare_params(w1_t, b1, w2_t, b2, dtype=jnp.bfloat16)

    out = linear_qnet_forward(x, w1p, w2p,
                              in_features=input_size, output_size=output_size)
    out = jax.block_until_ready(out)

    # Pure-JAX f32 reference of the original nn.Module math.
    ref = jnp.maximum(x @ w1_t + b1[None, :], 0.0) @ w2_t + b2[None, :]
    assert out.shape == (batch, output_size)
    # bf16 operands with f32 accumulation: allow bf16-level tolerance vs f32 reference.
    assert jnp.allclose(out, ref, atol=5e-2, rtol=5e-2), (out, ref)

    print("KERNEL_OK")
</pallas_src>

<mosaic_0001>
module attributes {stable_mosaic.version = 11 : i64} {
  func.func @_qnet_kernel(%arg0: i32, %arg1: memref<8x128xbf16, #tpu.memory_space<vmem>>, %arg2: memref<128x128xbf16, #tpu.memory_space<vmem>>, %arg3: memref<128x128xbf16, #tpu.memory_space<vmem>>, %arg4: memref<8x128xf32, #tpu.memory_space<vmem>>) attributes {dimension_semantics = [#tpu.dimension_semantics<parallel>], iteration_bounds = array<i64: 1>, scalar_prefetch = 0 : i64, scratch_operands = 0 : i64, tpu.core_type = #tpu.core_type<tc>, window_params = [{transform_indices = @transform_0, window_bounds = array<i64: 8, 128>}, {pipeline_mode = #tpu.pipeline_mode<synchronous>, transform_indices = @transform_1, window_bounds = array<i64: 128, 128>}, {pipeline_mode = #tpu.pipeline_mode<synchronous>, transform_indices = @transform_2, window_bounds = array<i64: 128, 128>}, {transform_indices = @transform_3, window_bounds = array<i64: 8, 128>}]} {
    %c0 = arith.constant 0 : index
    %c0_0 = arith.constant 0 : index
    %0 = vector.load %arg1[%c0, %c0_0] : memref<8x128xbf16, #tpu.memory_space<vmem>>, vector<8x128xbf16>
    %c0_1 = arith.constant 0 : index
    %c0_2 = arith.constant 0 : index
    %1 = vector.load %arg2[%c0_1, %c0_2] : memref<128x128xbf16, #tpu.memory_space<vmem>>, vector<128x128xbf16>
    %cst = arith.constant dense<0.000000e+00> : vector<8x128xf32>
    %2 = tpu.matmul %0, %1, %cst {dimension_numbers = #tpu.dot_dimension_numbers<[1], [0], [0], [1], [0, 0, 1, 1], [], []>} : vector<8x128xbf16>, vector<128x128xbf16>, vector<8x128xf32> -> vector<8x128xf32>
    %cst_3 = arith.constant 0.000000e+00 : f32
    %3 = vector.broadcast %cst_3 : f32 to vector<8x128xf32>
    %4 = arith.maximumf %2, %3 : vector<8x128xf32>
    %5 = arith.truncf %4 : vector<8x128xf32> to vector<8x128xbf16>
    %c0_4 = arith.constant 0 : index
    %c0_5 = arith.constant 0 : index
    %6 = vector.load %arg3[%c0_4, %c0_5] : memref<128x128xbf16, #tpu.memory_space<vmem>>, vector<128x128xbf16>
    %cst_6 = arith.constant dense<0.000000e+00> : vector<8x128xf32>
    %7 = tpu.matmul %5, %6, %cst_6 {dimension_numbers = #tpu.dot_dimension_numbers<[1], [0], [0], [1], [0, 0, 1, 1], [], []>} : vector<8x128xbf16>, vector<128x128xbf16>, vector<8x128xf32> -> vector<8x128xf32>
    %c0_7 = arith.constant 0 : index
    %c0_8 = arith.constant 0 : index
    %8 = vector.load %arg4[%c0_7, %c0_8] : memref<8x128xf32, #tpu.memory_space<vmem>>, vector<8x128xf32>
    tpu.vector_store %arg4[%c0_7, %c0_8], %7 {strides = array<i32>} : memref<8x128xf32, #tpu.memory_space<vmem>>, vector<8x128xf32>,
    return
  }
  func.func @transform_0(%arg0: i32) -> (i32, i32) {
    %c0_i32 = arith.constant 0 : i32
    %c0_i32_0 = arith.constant 0 : i32
    return %arg0, %c0_i32 : i32, i32
  }
  func.func @transform_1(%arg0: i32) -> (i32, i32) {
    %c0_i32 = arith.constant 0 : i32
    %c0_i32_0 = arith.constant 0 : i32
    %c0_i32_1 = arith.constant 0 : i32
    return %c0_i32, %c0_i32_0 : i32, i32
  }
  func.func @transform_2(%arg0: i32) -> (i32, i32) {
    %c0_i32 = arith.constant 0 : i32
    %c0_i32_0 = arith.constant 0 : i32
    %c0_i32_1 = arith.constant 0 : i32
    return %c0_i32, %c0_i32_0 : i32, i32
  }
  func.func @transform_3(%arg0: i32) -> (i32, i32) {
    %c0_i32 = arith.constant 0 : i32
    %c0_i32_0 = arith.constant 0 : i32
    return %arg0, %c0_i32 : i32, i32
  }
}

</mosaic_0001>

<llo_original>
// kernel: linear_qnet_forward.1
$region0: #{linear_qnet_forward.1}
  #allocation0 [shape = 'u32[]', space=smem, size = 0x4, offset = 0x4, fixed_abs, tag = 'smem constant byte address 0x4 - core index']
  #allocation1 [shape = 'u32[144,128]{1,0:T(1,128)}', space=vmem, size = 0x12000, scoped, tag = 'internal scratch']
  %s0 = inlined_call_operand.vmem [shape: bf16[8,128], index: 0, kind: input, shape index: {}]
  %s1 = inlined_call_operand.hbm [shape: bf16[128,128], index: 1, kind: input, shape index: {}]
  %s2 = inlined_call_operand.hbm [shape: bf16[128,128], index: 2, kind: input, shape index: {}]
  %s3 = inlined_call_operand.vmem [shape: f32[8,128], index: 3, kind: output, shape index: {}]
  %s4 = sld [smem:[#allocation0]]
  $region30: #{linear_qnet_forward.1} parent=0
    _
  %s6 = ssub.s32 1, %s4
  %s7 = scalar_select 0, %s6, %s4
  $region1: #{linear_qnet_forward.1} parent=0
    #allocation2 [shape = 'u8[32768]{0}', space=vmem, size = 0x8000, scoped, tag = 'input window, operand 1, single buffered']
    #allocation3 [shape = 's32[1]{0}', space=sflag, size = 0x4, scoped, tag = 'scoped memory for linear_qnet_forward.1']
    #allocation4 [shape = 'u8[32768]{0}', space=vmem, size = 0x8000, scoped, tag = 'input window, operand 2, single buffered']
    #allocation5 [shape = 's32[1]{0}', space=sflag, size = 0x4, scoped, tag = 'scoped memory for linear_qnet_forward.1']
    %8 = vsyncpa [#allocation3], 0
    %9 = vsyncpa [#allocation5], 0
    // Predicated region
    $region2: #{linear_qnet_forward.1} parent=1 // pred_check
      _
    $region3: #{linear_qnet_forward.1} parent=1 // pred_check_branch
      %11 = sbr.rel (0) target = $region5
    $region4: #{linear_qnet_forward.1} parent=1 // pred_region
      _
    $region5: #{linear_qnet_forward.1} parent=1 // pred_fallthru
      _
    // Predicated region
    $region6: #{linear_qnet_forward.1} parent=1 // pred_check
      _
    $region7: #{linear_qnet_forward.1} parent=1 // pred_check_branch
      %13 = sbr.rel (0) target = $region9
    $region8: #{linear_qnet_forward.1} parent=1 // pred_region
      %s15 = ssub.s32 1024, 1024
      %16 = vsyncadd [#allocation3], %s15
      %s17 = sshll.u32 [#allocation2], 4
      %s18 = int_to_ptr.vmem [resolvable:$true] %s17
      %23 = dma.hbm_to_vmem [thread:$0]  %s1, 1024, %s18, [#allocation3], 64, 64, 4
    $region9: #{linear_qnet_forward.1} parent=1 // pred_fallthru
      _
    // Predicated region
    $region10: #{linear_qnet_forward.1} parent=1 // pred_check
      _
    $region11: #{linear_qnet_forward.1} parent=1 // pred_check_branch
      %25 = sbr.rel (0) target = $region13
    $region12: #{linear_qnet_forward.1} parent=1 // pred_region
      %s27 = ssub.s32 1024, 1024
      %28 = vsyncadd [#allocation5], %s27
      %s29 = sshll.u32 [#allocation4], 4
      %s30 = int_to_ptr.vmem [resolvable:$true] %s29
      %35 = dma.hbm_to_vmem [thread:$0]  %s2, 1024, %s30, [#allocation5], 64, 64, 4
    $region13: #{linear_qnet_forward.1} parent=1 // pred_fallthru
      _
    // Predicated region
    $region14: #{linear_qnet_forward.1} parent=1 // pred_check
      _
    $region15: #{linear_qnet_forward.1} parent=1 // pred_check_branch
      %37 = sbr.rel (0) target = $region17
    $region16: #{linear_qnet_forward.1} parent=1 // pred_region
      %38 = dma.done [#allocation3], 1024
    $region17: #{linear_qnet_forward.1} parent=1 // pred_fallthru
      _
    // Predicated region
    $region18: #{linear_qnet_forward.1} parent=1 // pred_check
      _
    $region19: #{linear_qnet_forward.1} parent=1 // pred_check_branch
      %40 = sbr.rel (0) target = $region21
    $region20: #{linear_qnet_forward.1} parent=1 // pred_region
      %41 = dma.done [#allocation5], 1024
    $region21: #{linear_qnet_forward.1} parent=1 // pred_fallthru
      _
    %v43 = vld [vmem:[%s0] sm:$0xf]
    %v44 = vld [vmem:[#allocation2] sm:$0xf]
    %v45 = vld [vmem:[#allocation2 + $0x4] sm:$0xf]
    %v46 = vld [vmem:[#allocation2 + $0x8] sm:$0xf]
    %v47 = vld [vmem:[#allocation2 + $0xc] sm:$0xf]
    %v48 = vld [vmem:[#allocation2 + $0x10] sm:$0xf]
    %v49 = vld [vmem:[#allocation2 + $0x14] sm:$0xf]
    %v50 = vld [vmem:[#allocation2 + $0x18] sm:$0xf]
    %v51 = vld [vmem:[#allocation2 + $0x1c] sm:$0xf]
    %v52 = vld [vmem:[#allocation2 + $0x20] sm:$0xf]
    %v53 = vld [vmem:[#allocation2 + $0x24] sm:$0xf]
    %v54 = vld [vmem:[#allocation2 + $0x28] sm:$0xf]
    %v55 = vld [vmem:[#allocation2 + $0x2c] sm:$0xf]
    %v56 = vld [vmem:[#allocation2 + $0x30] sm:$0xf]
    %v57 = vld [vmem:[#allocation2 + $0x34] sm:$0xf]
    %v58 = vld [vmem:[#allocation2 + $0x38] sm:$0xf]
    %v59 = vld [vmem:[#allocation2 + $0x3c] sm:$0xf]
    %v76 = vunpack.c.l.b16 %v44
    %v77 = vunpack.c.l.b16 %v45
    %v78 = vunpack.c.l.b16 %v46
    %v79 = vunpack.c.l.b16 %v47
    %v80 = vunpack.c.l.b16 %v48
    %v81 = vunpack.c.l.b16 %v49
    %v82 = vunpack.c.l.b16 %v50
    %v83 = vunpack.c.l.b16 %v51
    %v84 = vunpack.c.l.b16 %v52
    %v85 = vunpack.c.l.b16 %v53
    %v86 = vunpack.c.l.b16 %v54
    %v87 = vunpack.c.l.b16 %v55
    %v88 = vunpack.c.l.b16 %v56
    %v89 = vunpack.c.l.b16 %v57
    %v90 = vunpack.c.l.b16 %v58
    %v91 = vunpack.c.l.b16 %v59
    %v92 = vpack.c.b16 %v77, %v76
    %v93 = vpack.c.b16 %v79, %v78
    %v94 = vpack.c.b16 %v81, %v80
    %v95 = vpack.c.b16 %v83, %v82
    %v96 = vpack.c.b16 %v85, %v84
    %v97 = vpack.c.b16 %v87, %v86
    %v98 = vpack.c.b16 %v89, %v88
    %v99 = vpack.c.b16 %v91, %v90
    %108 = vmatprep.subr.bf16.mxu0 0
    %109 = vmatpush1.bf16.msra.mxu0 %v99
    %110 = vmatprep.subr.bf16.mxu0 0
    %111 = vmatpush1.bf16.msra.mxu0 %v98
    %112 = vmatprep.subr.bf16.mxu0 0
    %113 = vmatpush1.bf16.msra.mxu0 %v97
    %114 = vmatprep.subr.bf16.mxu0 0
    %115 = vmatpush1.bf16.msra.mxu0 %v96
    %116 = vmatprep.subr.bf16.mxu0 0
    %117 = vmatpush1.bf16.msra.mxu0 %v95
    %118 = vmatprep.subr.bf16.mxu0 0
    %119 = vmatpush1.bf16.msra.mxu0 %v94
    %120 = vmatprep.subr.bf16.mxu0 0
    %121 = vmatpush1.bf16.msra.mxu0 %v93
    %122 = vmatprep.subr.bf16.mxu0 0
    %123 = vmatpush1.bf16.msra.mxu0 %v92
    %124 = vmatprep.subr.bf16.mxu0 0
    %125 = vmatpush2.bf16.msra.mxu0 0
    %126 = vmatprep.subr.bf16.mxu0 0
    %127 = vmatpush2.bf16.msra.mxu0 0
    %128 = vmatprep.subr.bf16.mxu0 0
    %129 = vmatpush2.bf16.msra.mxu0 0
    %130 = vmatprep.subr.bf16.mxu0 0
    %131 = vmatpush2.bf16.msra.mxu0 0
    %132 = vmatprep.subr.bf16.mxu0 0
    %133 = vmatpush2.bf16.msra.mxu0 0
    %134 = vmatprep.subr.bf16.mxu0 0
    %135 = vmatpush2.bf16.msra.mxu0 0
    %136 = vmatprep.subr.bf16.mxu0 0
    %137 = vmatpush2.bf16.msra.mxu0 0
    %138 = vmatprep.subr.bf16.mxu0 0
    %139 = vmatpush2.bf16.msra.mxu0 0
    %140 = vmatprep.mubr.bf16.mxu0 0
    %141 = vmatmul.mubr.bf16.gmra.mxu0 %v43
    %v142 = vpop.f32.mrf.mxu0
    %v143 = vadd.f32 0.0, %v142
    %v144 = vpop.f32.mrf.mxu0
    %v145 = vpop.f32.mrf.mxu0
    %v146 = vpop.f32.mrf.mxu0
    %147 = vdwg.mxu0
    %v148 = vmax.f32 %v143, 0.0
    %v149 = vpack.c.bf16 %v148, %v148
    %v150 = vld [vmem:[#allocation4] sm:$0xf]
    %v151 = vld [vmem:[#allocation4 + $0x4] sm:$0xf]
    %v152 = vld [vmem:[#allocation4 + $0x8] sm:$0xf]
    %v153 = vld [vmem:[#allocation4 + $0xc] sm:$0xf]
    %v154 = vld [vmem:[#allocation4 + $0x10] sm:$0xf]
    %v155 = vld [vmem:[#allocation4 + $0x14] sm:$0xf]
    %v156 = vld [vmem:[#allocation4 + $0x18] sm:$0xf]
    %v157 = vld [vmem:[#allocation4 + $0x1c] sm:$0xf]
    %v158 = vld [vmem:[#allocation4 + $0x20] sm:$0xf]
    %v159 = vld [vmem:[#allocation4 + $0x24] sm:$0xf]
    %v160 = vld [vmem:[#allocation4 + $0x28] sm:$0xf]
    %v161 = vld [vmem:[#allocation4 + $0x2c] sm:$0xf]
    %v162 = vld [vmem:[#allocation4 + $0x30] sm:$0xf]
    %v163 = vld [vmem:[#allocation4 + $0x34] sm:$0xf]
    %v164 = vld [vmem:[#allocation4 + $0x38] sm:$0xf]
    %v165 = vld [vmem:[#allocation4 + $0x3c] sm:$0xf]
    %v182 = vunpack.c.l.b16 %v150
    %v183 = vunpack.c.l.b16 %v151
    %v184 = vunpack.c.l.b16 %v152
    %v185 = vunpack.c.l.b16 %v153
    %v186 = vunpack.c.l.b16 %v154
    %v187 = vunpack.c.l.b16 %v155
    %v188 = vunpack.c.l.b16 %v156
    %v189 = vunpack.c.l.b16 %v157
    %v190 = vunpack.c.l.b16 %v158
    %v191 = vunpack.c.l.b16 %v159
    %v192 = vunpack.c.l.b16 %v160
    %v193 = vunpack.c.l.b16 %v161
    %v194 = vunpack.c.l.b16 %v162
    %v195 = vunpack.c.l.b16 %v163
    %v196 = vunpack.c.l.b16 %v164
    %v197 = vunpack.c.l.b16 %v165
    %v198 = vpack.c.b16 %v183, %v182
    %v199 = vpack.c.b16 %v185, %v184
    %v200 = vpack.c.b16 %v187, %v186
    %v201 = vpack.c.b16 %v189, %v188
    %v202 = vpack.c.b16 %v191, %v190
    %v203 = vpack.c.b16 %v193, %v192
    %v204 = vpack.c.b16 %v195, %v194
    %v205 = vpack.c.b16 %v197, %v196
    %214 = vmatprep.subr.bf16.mxu0 0
    %215 = vmatpush1.bf16.msra.mxu0 %v205
    %216 = vmatprep.subr.bf16.mxu0 0
    %217 = vmatpush1.bf16.msra.mxu0 %v204
    %218 = vmatprep.subr.bf16.mxu0 0
    %219 = vmatpush1.bf16.msra.mxu0 %v203
    %220 = vmatprep.subr.bf16.mxu0 0
    %221 = vmatpush1.bf16.msra.mxu0 %v202
    %222 = vmatprep.subr.bf16.mxu0 0
    %223 = vmatpush1.bf16.msra.mxu0 %v201
    %224 = vmatprep.subr.bf16.mxu0 0
    %225 = vmatpush1.bf16.msra.mxu0 %v200
    %226 = vmatprep.subr.bf16.mxu0 0
    %227 = vmatpush1.bf16.msra.mxu0 %v199
    %228 = vmatprep.subr.bf16.mxu0 0
    %229 = vmatpush1.bf16.msra.mxu0 %v198
    %230 = vmatprep.subr.bf16.mxu0 0
    %231 = vmatpush2.bf16.msra.mxu0 0
    %232 = vmatprep.subr.bf16.mxu0 0
    %233 = vmatpush2.bf16.msra.mxu0 0
    %234 = vmatprep.subr.bf16.mxu0 0
    %235 = vmatpush2.bf16.msra.mxu0 0
    %236 = vmatprep.subr.bf16.mxu0 0
    %237 = vmatpush2.bf16.msra.mxu0 0
    %238 = vmatprep.subr.bf16.mxu0 0
    %239 = vmatpush2.bf16.msra.mxu0 0
    %240 = vmatprep.subr.bf16.mxu0 0
    %241 = vmatpush2.bf16.msra.mxu0 0
    %242 = vmatprep.subr.bf16.mxu0 0
    %243 = vmatpush2.bf16.msra.mxu0 0
    %244 = vmatprep.subr.bf16.mxu0 0
    %245 = vmatpush2.bf16.msra.mxu0 0
    %246 = vmatprep.mubr.bf16.mxu0 0
    %247 = vmatmul.mubr.bf16.gmra.mxu0 %v149
    %v248 = vpop.f32.mrf.mxu0
    %v249 = vadd.f32 0.0, %v248
    %v250 = vpop.f32.mrf.mxu0
    %v251 = vpop.f32.mrf.mxu0
    %v252 = vpop.f32.mrf.mxu0
    %253 = vdwg.mxu0
    %254 = vst [vmem:[%s3] sm:$0xff] %v249
    // Predicated region
    $region22: #{linear_qnet_forward.1} parent=1 // pred_check
      _
    $region23: #{linear_qnet_forward.1} parent=1 // pred_check_branch
      %256 = sbr.rel (0) target = $region25
    $region24: #{linear_qnet_forward.1} parent=1 // pred_region
      _
    $region25: #{linear_qnet_forward.1} parent=1 // pred_fallthru
      _
    // Predicated region
    $region26: #{linear_qnet_forward.1} parent=1 // pred_check
      _
    $region27: #{linear_qnet_forward.1} parent=1 // pred_check_branch
      %258 = sbr.rel (0) target = $region29
    $region28: #{linear_qnet_forward.1} parent=1 // pred_region
      _
    $region29: #{linear_qnet_forward.1} parent=1 // pred_fallthru
      _
    %259 = vsyncpa [#allocation3], 1
    %260 = vsyncpa [#allocation5], 1

</llo_original>
